<compile_context>
chip_gen: v5e
topology: v5e:2x2
jax: 0.10.0
libtpu: 0.0.40
codegen_flags: <defaults>
</compile_context>

<pallas_src>
import jax
import jax.numpy as jnp
import numpy as np
from jax import lax
from jax.experimental import pallas as pl
from jax.experimental.pallas import tpu as pltpu

# Small synthetic shapes consistent with the module (n_feats -> C).
N, C, H, W = 2, 8, 16, 16
K = 3
PAD = K // 2
RESCALE = 1.0            # module default rescale=1 (compile-time constant)

NH = N * H               # packed row axis (sublanes) = 32
WC = W * C               # packed lane axis = 128 (lane-dense)


def _softplus(z):
    # Stable softplus matching torch.nn.Softplus(beta=1, threshold=20).
    sp = jnp.maximum(z, 0.0) + jnp.log(1.0 + jnp.exp(-jnp.abs(z)))
    return jnp.where(z > 20.0, z, sp)


def var_block_kernel(x_ref, wdw_ref, bdw_ref, wb_ref, bb_ref, alpha_ref, o_ref):
    """Whole batch in one step, packed (rows = n*H + h, lanes = w*C + c).

    x_ref    : (N*H, W*C)     packed input
    wdw_ref  : (3*W*C, W*C)   depthwise 3x3 conv as block-banded matrix
    bdw_ref  : (1, W*C)       depthwise bias (tiled over w)
    wb_ref   : (3*W*C, W*C)   dense 3x3 conv as block-banded matrix
    bb_ref   : (1, W*C)       dense bias (tiled over w)
    alpha_ref: (1, 1)         PReLU alpha (SMEM scalar)
    o_ref    : (N*H, W*C)     packed output
    """
    x = x_ref[...]                                        # (NH, WC)

    # Row masks: h == 0 / h == H-1 inside each image (also kills the batch seam).
    row = lax.broadcasted_iota(jnp.int32, (NH, 1), 0)
    h_in_img = row % H
    not_top = h_in_img != 0
    not_bot = h_in_img != (H - 1)
    zero_row = jnp.zeros((1, WC), jnp.float32)

    def shifted_stack(a):
        # [a(h-1) | a(h) | a(h+1)] along lanes, zero rows outside each image.
        up = jnp.concatenate([zero_row, a[:-1, :]], axis=0)
        up = jnp.where(not_top, up, 0.0)
        down = jnp.concatenate([a[1:, :], zero_row], axis=0)
        down = jnp.where(not_bot, down, 0.0)
        return jnp.concatenate([up, a, down], axis=1)     # (NH, 3*WC)

    # ---- depthwise 3x3 conv (groups == C) + softplus mask ----
    dw = jnp.dot(shifted_stack(x), wdw_ref[...],
                 preferred_element_type=jnp.float32) + bdw_ref[...]
    y = _softplus(dw) * x                                  # mask * x

    # ---- dense 3x3 conv (C -> C): single im2col-style matmul ----
    res = jnp.dot(shifted_stack(y), wb_ref[...],
                  preferred_element_type=jnp.float32) + bb_ref[...]

    # ---- PReLU (single shared alpha) + rescale + residual ----
    alpha = alpha_ref[0, 0]
    res = jnp.where(res >= 0.0, res, alpha * res)
    o_ref[...] = res * RESCALE + x


def _pack_conv_weights(w_dw, w_body):
    """Build the block-banded (3*W*C, W*C) matmul matrices for both convs.

    Row index = dy*(W*C) + win*C + c_in, col index = wout*C + c_out,
    value = conv weight [dy, dx = win - wout + 1] (zero when dx out of range).
    """
    win = jnp.arange(W)
    wout = jnp.arange(W)
    dxm = win[:, None] - wout[None, :] + PAD              # dx for (win, wout)
    valid = (dxm >= 0) & (dxm < K)
    dxc = jnp.clip(dxm, 0, K - 1)

    # depthwise: (C,1,K,K) -> [dy, dx, c]
    wdw_k = jnp.transpose(w_dw[:, 0], (1, 2, 0))          # (K, K, C)
    wsel = wdw_k[:, dxc, :]                               # (K, W, W, C)  [dy, win, wout, c]
    wsel = jnp.where(valid[None, :, :, None], wsel, 0.0)
    eye_c = jnp.eye(C, dtype=jnp.float32)
    m_dw = wsel[:, :, None, :, :] * eye_c[None, None, :, None, :]   # (K, W, Cin, W, Cout)
    wdw_mat = m_dw.reshape(K * W * C, W * C)

    # dense: (Cout,Cin,K,K) -> [dy, dx, ci, co]
    wb_k = jnp.transpose(w_body, (2, 3, 1, 0))            # (K, K, Cin, Cout)
    bsel = wb_k[:, dxc, :, :]                             # (K, W, W, Cin, Cout)
    bsel = jnp.where(valid[None, :, :, None, None], bsel, 0.0)
    m_b = jnp.transpose(bsel, (0, 1, 3, 2, 4))            # (K, W, Cin, W, Cout)
    wb_mat = m_b.reshape(K * W * C, W * C)
    return wdw_mat, wb_mat


@jax.jit
def var_block_simple(x_nchw, w_dw, b_dw, w_body, b_body, alpha):
    """x_nchw: (N,C,H,W); w_dw: (C,1,3,3); w_body: (C,C,3,3); b_*: (C,); alpha: (1,)."""
    x = jnp.transpose(x_nchw, (0, 2, 3, 1)).reshape(NH, WC)          # packed (N*H, W*C)

    wdw_mat, wb_mat = _pack_conv_weights(w_dw, w_body)
    bdw_p = jnp.tile(b_dw, W).reshape(1, WC)
    bb_p = jnp.tile(b_body, W).reshape(1, WC)
    alpha2 = alpha.reshape(1, 1)

    cost = pl.CostEstimate(
        flops=2 * 2 * NH * (K * WC) * WC + 10 * NH * WC,   # 2 matmuls + elementwise
        transcendentals=2 * NH * WC,                       # exp + log per element
        bytes_accessed=4 * (2 * NH * WC + 2 * K * WC * WC + 2 * WC + 1),
    )

    out_packed = pl.pallas_call(
        var_block_kernel,
        out_shape=jax.ShapeDtypeStruct((NH, WC), jnp.float32),
        grid=(1,),
        in_specs=[
            pl.BlockSpec((NH, WC), lambda i: (0, 0)),
            pl.BlockSpec((K * WC, WC), lambda i: (0, 0)),
            pl.BlockSpec((1, WC), lambda i: (0, 0)),
            pl.BlockSpec((K * WC, WC), lambda i: (0, 0)),
            pl.BlockSpec((1, WC), lambda i: (0, 0)),
            pl.BlockSpec((1, 1), lambda i: (0, 0),
                         memory_space=pltpu.MemorySpace.SMEM),
        ],
        out_specs=pl.BlockSpec((NH, WC), lambda i: (0, 0)),
        compiler_params=pltpu.CompilerParams(
            dimension_semantics=("arbitrary",)),
        cost_estimate=cost,
    )(x, wdw_mat, bdw_p, wb_mat, bb_p, alpha2)

    out = out_packed.reshape(N, H, W, C)
    return jnp.transpose(out, (0, 3, 1, 2))                          # back to NCHW


def reference(x_nchw, w_dw, b_dw, w_body, b_body, alpha):
    """Pure-JAX reference with identical semantics (NHWC loops, explicit pad)."""
    x = jnp.transpose(x_nchw, (0, 2, 3, 1))
    xp = jnp.pad(x, ((0, 0), (PAD, PAD), (PAD, PAD), (0, 0)))
    wdw = jnp.transpose(w_dw[:, 0], (1, 2, 0))                      # (3,3,C)
    dw = jnp.zeros_like(x)
    for dy in range(K):
        for dx in range(K):
            dw = dw + xp[:, dy:dy + H, dx:dx + W, :] * wdw[dy, dx]
    dw = dw + b_dw
    y = _softplus(dw) * x
    yp = jnp.pad(y, ((0, 0), (PAD, PAD), (PAD, PAD), (0, 0)))
    wb = jnp.transpose(w_body, (2, 3, 1, 0))                        # (3,3,Cin,Cout)
    res = jnp.zeros_like(x)
    for dy in range(K):
        for dx in range(K):
            res = res + jnp.einsum('nhwc,cd->nhwd',
                                   yp[:, dy:dy + H, dx:dx + W, :], wb[dy, dx])
    res = res + b_body
    res = jnp.where(res >= 0.0, res, alpha[0] * res)
    out = res * RESCALE + x
    return jnp.transpose(out, (0, 3, 1, 2))


if __name__ == "__main__":
    key = jax.random.PRNGKey(0)
    kx, k1, k2, k3, k4 = jax.random.split(key, 5)

    # Deterministic synthetic parameters (shapes follow nn.Module __init__).
    x = jax.random.normal(kx, (N, C, H, W), jnp.float32)
    w_dw = 0.1 * jax.random.normal(k1, (C, 1, K, K), jnp.float32)    # depthwise conv
    b_dw = 0.1 * jax.random.normal(k2, (C,), jnp.float32)
    w_body = 0.1 * jax.random.normal(k3, (C, C, K, K), jnp.float32)  # dense conv
    b_body = 0.1 * jax.random.normal(k4, (C,), jnp.float32)
    alpha = jnp.full((1,), 0.25, jnp.float32)                        # nn.PReLU() init

    out = var_block_simple(x, w_dw, b_dw, w_body, b_body, alpha)
    out = jax.block_until_ready(out)

    ref = reference(x, w_dw, b_dw, w_body, b_body, alpha)
    np.testing.assert_allclose(np.asarray(out), np.asarray(ref),
                               atol=2e-3, rtol=2e-3)
    print("KERNEL_OK")
</pallas_src>

<mosaic_0001>
module attributes {stable_mosaic.version = 11 : i64} {
  func.func @var_block_kernel(%arg0: i32, %arg1: memref<32x128xf32, #tpu.memory_space<vmem>>, %arg2: memref<384x128xf32, #tpu.memory_space<vmem>>, %arg3: memref<1x128xf32, #tpu.memory_space<vmem>>, %arg4: memref<384x128xf32, #tpu.memory_space<vmem>>, %arg5: memref<1x128xf32, #tpu.memory_space<vmem>>, %arg6: memref<1x1xf32, #tpu.memory_space<smem>>, %arg7: memref<32x128xf32, #tpu.memory_space<vmem>>) attributes {dimension_semantics = [#tpu.dimension_semantics<arbitrary>], iteration_bounds = array<i64: 1>, scalar_prefetch = 0 : i64, scratch_operands = 0 : i64, tpu.core_type = #tpu.core_type<tc>, window_params = [{pipeline_mode = #tpu.pipeline_mode<synchronous>, transform_indices = @transform_0, window_bounds = array<i64: 32, 128>}, {pipeline_mode = #tpu.pipeline_mode<synchronous>, transform_indices = @transform_1, window_bounds = array<i64: 384, 128>}, {pipeline_mode = #tpu.pipeline_mode<synchronous>, transform_indices = @transform_2, window_bounds = array<i64: 1, 128>}, {pipeline_mode = #tpu.pipeline_mode<synchronous>, transform_indices = @transform_3, window_bounds = array<i64: 384, 128>}, {pipeline_mode = #tpu.pipeline_mode<synchronous>, transform_indices = @transform_4, window_bounds = array<i64: 1, 128>}, {transform_indices = @transform_5, window_bounds = array<i64: 1, 1>}, {pipeline_mode = #tpu.pipeline_mode<synchronous>, transform_indices = @transform_6, window_bounds = array<i64: 32, 128>}]} {
    %c0 = arith.constant 0 : index
    %c0_0 = arith.constant 0 : index
    %0 = vector.load %arg1[%c0, %c0_0] : memref<32x128xf32, #tpu.memory_space<vmem>>, vector<32x128xf32>
    %1 = tpu.iota {dimensions = array<i32: 0>} : vector<32x1xi32>
    %c16_i32 = arith.constant 16 : i32
    %c0_i32 = arith.constant 0 : i32
    %2 = arith.cmpi eq, %c16_i32, %c0_i32 : i32
    %c1_i32 = arith.constant 1 : i32
    %3 = arith.select %2, %c1_i32, %c16_i32 : i32
    %4 = vector.broadcast %3 : i32 to vector<32x1xi32>
    %5 = arith.remsi %1, %4 : vector<32x1xi32>
    %c0_i32_1 = arith.constant 0 : i32
    %6 = vector.broadcast %c0_i32_1 : i32 to vector<32x1xi32>
    %7 = arith.cmpi ne, %5, %6 : vector<32x1xi32>
    %c0_i32_2 = arith.constant 0 : i32
    %8 = vector.broadcast %c0_i32_2 : i32 to vector<32x1xi32>
    %9 = arith.cmpi slt, %5, %8 : vector<32x1xi32>
    %c0_i32_3 = arith.constant 0 : i32
    %10 = arith.cmpi slt, %3, %c0_i32_3 : i32
    %11 = vector.broadcast %10 : i1 to vector<32x1xi1>
    %12 = vector.broadcast %11 : vector<32x1xi1> to vector<32x1xi1>
    %13 = arith.xori %9, %12 : vector<32x1xi1>
    %14 = arith.andi %13, %7 : vector<32x1xi1>
    %15 = vector.broadcast %3 : i32 to vector<32x1xi32>
    %16 = arith.addi %5, %15 : vector<32x1xi32>
    %17 = arith.select %14, %16, %5 : vector<32x1xi1>, vector<32x1xi32>
    %c0_i32_4 = arith.constant 0 : i32
    %18 = vector.broadcast %c0_i32_4 : i32 to vector<32x1xi32>
    %19 = arith.cmpi ne, %17, %18 : vector<32x1xi32>
    %c15_i32 = arith.constant 15 : i32
    %20 = vector.broadcast %c15_i32 : i32 to vector<32x1xi32>
    %21 = arith.cmpi ne, %17, %20 : vector<32x1xi32>
    %cst = arith.constant 0.000000e+00 : f32
    %22 = vector.broadcast %cst : f32 to vector<1x128xf32>
    %23 = vector.extract_strided_slice %0 {offsets = [0, 0], sizes = [31, 128], strides = [1, 1]} : vector<32x128xf32> to vector<31x128xf32>
    %24 = tpu.concatenate %22, %23 in 0 : vector<1x128xf32>, vector<31x128xf32> -> vector<32x128xf32>
    %cst_5 = arith.constant 0.000000e+00 : f32
    %25 = vector.shape_cast %19 : vector<32x1xi1> to vector<32x1xi1>
    %26 = vector.broadcast %25 : vector<32x1xi1> to vector<32x128xi1>
    %27 = vector.broadcast %cst_5 : f32 to vector<32x128xf32>
    %28 = arith.select %26, %24, %27 : vector<32x128xi1>, vector<32x128xf32>
    %29 = vector.extract_strided_slice %0 {offsets = [1, 0], sizes = [31, 128], strides = [1, 1]} : vector<32x128xf32> to vector<31x128xf32>
    %30 = tpu.concatenate %29, %22 in 0 : vector<31x128xf32>, vector<1x128xf32> -> vector<32x128xf32>
    %cst_6 = arith.constant 0.000000e+00 : f32
    %31 = vector.shape_cast %21 : vector<32x1xi1> to vector<32x1xi1>
    %32 = vector.broadcast %31 : vector<32x1xi1> to vector<32x128xi1>
    %33 = vector.broadcast %cst_6 : f32 to vector<32x128xf32>
    %34 = arith.select %32, %30, %33 : vector<32x128xi1>, vector<32x128xf32>
    %35 = tpu.concatenate %28, %0, %34 in 1 : vector<32x128xf32>, vector<32x128xf32>, vector<32x128xf32> -> vector<32x384xf32>
    %c0_7 = arith.constant 0 : index
    %c0_8 = arith.constant 0 : index
    %36 = vector.load %arg2[%c0_7, %c0_8] : memref<384x128xf32, #tpu.memory_space<vmem>>, vector<384x128xf32>
    %cst_9 = arith.constant dense<0.000000e+00> : vector<32x128xf32>
    %37 = tpu.matmul %35, %36, %cst_9 {dimension_numbers = #tpu.dot_dimension_numbers<[1], [0], [0], [1], [0, 0, 1, 1], [], []>} : vector<32x384xf32>, vector<384x128xf32>, vector<32x128xf32> -> vector<32x128xf32>
    %c0_10 = arith.constant 0 : index
    %c0_11 = arith.constant 0 : index
    %38 = vector.load %arg3[%c0_10, %c0_11] : memref<1x128xf32, #tpu.memory_space<vmem>>, vector<1x128xf32>
    %39 = vector.broadcast %38 : vector<1x128xf32> to vector<32x128xf32>
    %40 = arith.addf %37, %39 : vector<32x128xf32>
    %cst_12 = arith.constant 0.000000e+00 : f32
    %41 = vector.broadcast %cst_12 : f32 to vector<32x128xf32>
    %42 = arith.maximumf %40, %41 : vector<32x128xf32>
    %43 = math.absf %40 : vector<32x128xf32>
    %cst_13 = arith.constant 0.000000e+00 : f32
    %44 = vector.broadcast %cst_13 : f32 to vector<32x128xf32>
    %45 = arith.subf %44, %43 : vector<32x128xf32>
    %46 = math.exp %45 : vector<32x128xf32>
    %cst_14 = arith.constant 1.000000e+00 : f32
    %47 = vector.broadcast %cst_14 : f32 to vector<32x128xf32>
    %48 = arith.addf %47, %46 : vector<32x128xf32>
    %49 = math.log %48 : vector<32x128xf32>
    %50 = arith.addf %42, %49 : vector<32x128xf32>
    %cst_15 = arith.constant 2.000000e+01 : f32
    %51 = vector.broadcast %cst_15 : f32 to vector<32x128xf32>
    %52 = arith.cmpf ogt, %40, %51 : vector<32x128xf32>
    %53 = arith.select %52, %40, %50 : vector<32x128xi1>, vector<32x128xf32>
    %54 = arith.mulf %53, %0 : vector<32x128xf32>
    %55 = vector.extract_strided_slice %54 {offsets = [0, 0], sizes = [31, 128], strides = [1, 1]} : vector<32x128xf32> to vector<31x128xf32>
    %56 = tpu.concatenate %22, %55 in 0 : vector<1x128xf32>, vector<31x128xf32> -> vector<32x128xf32>
    %cst_16 = arith.constant 0.000000e+00 : f32
    %57 = vector.shape_cast %19 : vector<32x1xi1> to vector<32x1xi1>
    %58 = vector.broadcast %57 : vector<32x1xi1> to vector<32x128xi1>
    %59 = vector.broadcast %cst_16 : f32 to vector<32x128xf32>
    %60 = arith.select %58, %56, %59 : vector<32x128xi1>, vector<32x128xf32>
    %61 = vector.extract_strided_slice %54 {offsets = [1, 0], sizes = [31, 128], strides = [1, 1]} : vector<32x128xf32> to vector<31x128xf32>
    %62 = tpu.concatenate %61, %22 in 0 : vector<31x128xf32>, vector<1x128xf32> -> vector<32x128xf32>
    %cst_17 = arith.constant 0.000000e+00 : f32
    %63 = vector.shape_cast %21 : vector<32x1xi1> to vector<32x1xi1>
    %64 = vector.broadcast %63 : vector<32x1xi1> to vector<32x128xi1>
    %65 = vector.broadcast %cst_17 : f32 to vector<32x128xf32>
    %66 = arith.select %64, %62, %65 : vector<32x128xi1>, vector<32x128xf32>
    %67 = tpu.concatenate %60, %54, %66 in 1 : vector<32x128xf32>, vector<32x128xf32>, vector<32x128xf32> -> vector<32x384xf32>
    %c0_18 = arith.constant 0 : index
    %c0_19 = arith.constant 0 : index
    %68 = vector.load %arg4[%c0_18, %c0_19] : memref<384x128xf32, #tpu.memory_space<vmem>>, vector<384x128xf32>
    %cst_20 = arith.constant dense<0.000000e+00> : vector<32x128xf32>
    %69 = tpu.matmul %67, %68, %cst_20 {dimension_numbers = #tpu.dot_dimension_numbers<[1], [0], [0], [1], [0, 0, 1, 1], [], []>} : vector<32x384xf32>, vector<384x128xf32>, vector<32x128xf32> -> vector<32x128xf32>
    %c0_21 = arith.constant 0 : index
    %c0_22 = arith.constant 0 : index
    %70 = vector.load %arg5[%c0_21, %c0_22] : memref<1x128xf32, #tpu.memory_space<vmem>>, vector<1x128xf32>
    %71 = vector.broadcast %70 : vector<1x128xf32> to vector<32x128xf32>
    %72 = arith.addf %69, %71 : vector<32x128xf32>
    %c0_23 = arith.constant 0 : index
    %c0_24 = arith.constant 0 : index
    %73 = memref.load %arg6[%c0_23, %c0_24] : memref<1x1xf32, #tpu.memory_space<smem>>
    %cst_25 = arith.constant 0.000000e+00 : f32
    %74 = vector.broadcast %cst_25 : f32 to vector<32x128xf32>
    %75 = arith.cmpf oge, %72, %74 : vector<32x128xf32>
    %76 = vector.broadcast %73 : f32 to vector<32x128xf32>
    %77 = arith.mulf %76, %72 : vector<32x128xf32>
    %78 = arith.select %75, %72, %77 : vector<32x128xi1>, vector<32x128xf32>
    %cst_26 = arith.constant 1.000000e+00 : f32
    %79 = vector.broadcast %cst_26 : f32 to vector<32x128xf32>
    %80 = arith.mulf %78, %79 : vector<32x128xf32>
    %81 = arith.addf %80, %0 : vector<32x128xf32>
    %c0_27 = arith.constant 0 : index
    %c0_28 = arith.constant 0 : index
    %82 = vector.load %arg7[%c0_27, %c0_28] : memref<32x128xf32, #tpu.memory_space<vmem>>, vector<32x128xf32>
    tpu.vector_store %arg7[%c0_27, %c0_28], %81 {strides = array<i32>} : memref<32x128xf32, #tpu.memory_space<vmem>>, vector<32x128xf32>,
    return
  }
  func.func @transform_0(%arg0: i32) -> (i32, i32) {
    %c0_i32 = arith.constant 0 : i32
    %c0_i32_0 = arith.constant 0 : i32
    %c0_i32_1 = arith.constant 0 : i32
    return %c0_i32, %c0_i32_0 : i32, i32
  }
  func.func @transform_1(%arg0: i32) -> (i32, i32) {
    %c0_i32 = arith.constant 0 : i32
    %c0_i32_0 = arith.constant 0 : i32
    %c0_i32_1 = arith.constant 0 : i32
    return %c0_i32, %c0_i32_0 : i32, i32
  }
  func.func @transform_2(%arg0: i32) -> (i32, i32) {
    %c0_i32 = arith.constant 0 : i32
    %c0_i32_0 = arith.constant 0 : i32
    %c0_i32_1 = arith.constant 0 : i32
    return %c0_i32, %c0_i32_0 : i32, i32
  }
  func.func @transform_3(%arg0: i32) -> (i32, i32) {
    %c0_i32 = arith.constant 0 : i32
    %c0_i32_0 = arith.constant 0 : i32
    %c0_i32_1 = arith.constant 0 : i32
    return %c0_i32, %c0_i32_0 : i32, i32
  }
  func.func @transform_4(%arg0: i32) -> (i32, i32) {
    %c0_i32 = arith.constant 0 : i32
    %c0_i32_0 = arith.constant 0 : i32
    %c0_i32_1 = arith.constant 0 : i32
    return %c0_i32, %c0_i32_0 : i32, i32
  }
  func.func @transform_5(%arg0: i32) -> (i32, i32) {
    %c0_i32 = arith.constant 0 : i32
    %c0_i32_0 = arith.constant 0 : i32
    %c0_i32_1 = arith.constant 0 : i32
    return %c0_i32, %c0_i32_0 : i32, i32
  }
  func.func @transform_6(%arg0: i32) -> (i32, i32) {
    %c0_i32 = arith.constant 0 : i32
    %c0_i32_0 = arith.constant 0 : i32
    %c0_i32_1 = arith.constant 0 : i32
    return %c0_i32, %c0_i32_0 : i32, i32
  }
}

</mosaic_0001>

<llo_original>
// kernel: tile.13
$region0: #{tile.13}
  #allocation0 [shape = 's32[1]{0}', space=sflag, size = 0x4, scoped, tag = 'scoped memory for tile.13']
  %s0 = inlined_call_operand.vmem [shape: f32[8], index: 0, kind: input, shape index: {}]
  %s1 = inlined_call_operand.vmem [shape: f32[16,8], index: 1, kind: output, shape index: {}]
  // Predicated region
  $region2: #{tile.13} parent=0 // pred_check
    _
  $region3: #{tile.13} parent=0 // pred_check_branch
    %3 = sbr.rel (0) target = $region5
  $region4: #{tile.13} parent=0 // pred_region
    _
  $region5: #{tile.13} parent=0 // pred_fallthru
    _
  %v4 = vld [vmem:[%s0] ss:$0 sm:$0xff]
  %5 = vst [vmem:[%s1] sm:$0xff] %v4
  %s6 = scalar_lea.vmem %s1, 8
  %7 = vst [vmem:[%s6] sm:$0xff] %v4

// kernel: tile.14
$region0: #{tile.14}
  %s0 = inlined_call_operand.vmem [shape: f32[16,8], index: 0, kind: input, shape index: {}]
  %s1 = inlined_call_operand.vmem [shape: f32[1,128], index: 1, kind: output, shape index: {}]
  $region1: #{tile.14} parent=0
    #allocation0 [shape = 'u8[4096]{0}', space=vmem, size = 0x1000, scoped, tag = 'scoped mem for output reshape']
    %v2 = vld [vmem:[%s0] sm:$0x1]
    %vm3 = vcmask 64512
    %4 = vst.msk [vmem:[#allocation0] sm:$0x1] %vm3, %v2
    %s5 = scalar_lea.vmem %s0, 15
    %v6 = vld [vmem:[%s5] sm:$0x1]
    %7 = vrot.lane.b32.xlu0 %v6, 120
    %v8 = vpop.permute.xlu0 %7
    %vm9 = vcmask 1048512
    %10 = vst.msk [vmem:[#allocation0] sm:$0x1] %vm9, %v8
    %s11 = scalar_lea.vmem %s0, 14
    %v12 = vld [vmem:[%s11] sm:$0x1]
    %13 = vrot.lane.b32.xlu0 %v12, 112
    %v14 = vpop.permute.xlu0 %13
    %vm15 = vcmask 982912
    %16 = vst.msk [vmem:[#allocation0] sm:$0x1] %vm15, %v14
    %s17 = scalar_lea.vmem %s0, 13
    %v18 = vld [vmem:[%s17] sm:$0x1]
    %19 = vrot.lane.b32.xlu0 %v18, 104
    %v20 = vpop.permute.xlu0 %19
    %vm21 = vcmask 917312
    %22 = vst.msk [vmem:[#allocation0] sm:$0x1] %vm21, %v20
    %s23 = scalar_lea.vmem %s0, 12
    %v24 = vld [vmem:[%s23] sm:$0x1]
    %25 = vrot.lane.b32.xlu0 %v24, 96
    %v26 = vpop.permute.xlu0 %25
    %vm27 = vcmask 851712
    %28 = vst.msk [vmem:[#allocation0] sm:$0x1] %vm27, %v26
    %s29 = scalar_lea.vmem %s0, 11
    %v30 = vld [vmem:[%s29] sm:$0x1]
    %31 = vrot.lane.b32.xlu0 %v30, 88
    %v32 = vpop.permute.xlu0 %31
    %vm33 = vcmask 786112
    %34 = vst.msk [vmem:[#allocation0] sm:$0x1] %vm33, %v32
    %s35 = scalar_lea.vmem %s0, 10
    %v36 = vld [vmem:[%s35] sm:$0x1]
    %37 = vrot.lane.b32.xlu0 %v36, 80
    %v38 = vpop.permute.xlu0 %37
    %vm39 = vcmask 720512
    %40 = vst.msk [vmem:[#allocation0] sm:$0x1] %vm39, %v38
    %s41 = scalar_lea.vmem %s0, 9
    %v42 = vld [vmem:[%s41] sm:$0x1]
    %43 = vrot.lane.b32.xlu0 %v42, 72
    %v44 = vpop.permute.xlu0 %43
    %vm45 = vcmask 654912
    %46 = vst.msk [vmem:[#allocation0] sm:$0x1] %vm45, %v44
    %s47 = scalar_lea.vmem %s0, 8
    %v48 = vld [vmem:[%s47] sm:$0x1]
    %49 = vrot.lane.b32.xlu0 %v48, 64
    %v50 = vpop.permute.xlu0 %49
    %vm51 = vcmask 589312
    %52 = vst.msk [vmem:[#allocation0] sm:$0x1] %vm51, %v50
    %s53 = scalar_lea.vmem %s0, 7
    %v54 = vld [vmem:[%s53] sm:$0x1]
    %55 = vrot.lane.b32.xlu0 %v54, 56
    %v56 = vpop.permute.xlu0 %55
    %vm57 = vcmask 523712
    %58 = vst.msk [vmem:[#allocation0] sm:$0x1] %vm57, %v56
    %s59 = scalar_lea.vmem %s0, 6
    %v60 = vld [vmem:[%s59] sm:$0x1]
    %61 = vrot.lane.b32.xlu0 %v60, 48
    %v62 = vpop.permute.xlu0 %61
    %vm63 = vcmask 458112
    %64 = vst.msk [vmem:[#allocation0] sm:$0x1] %vm63, %v62
    %s65 = scalar_lea.vmem %s0, 5
    %v66 = vld [vmem:[%s65] sm:$0x1]
    %67 = vrot.lane.b32.xlu0 %v66, 40
    %v68 = vpop.permute.xlu0 %67
    %vm69 = vcmask 392512
    %70 = vst.msk [vmem:[#allocation0] sm:$0x1] %vm69, %v68
    %s71 = scalar_lea.vmem %s0, 4
    %v72 = vld [vmem:[%s71] sm:$0x1]
    %73 = vrot.lane.b32.xlu0 %v72, 32
    %v74 = vpop.permute.xlu0 %73
    %vm75 = vcmask 326912
    %76 = vst.msk [vmem:[#allocation0] sm:$0x1] %vm75, %v74
    %s77 = scalar_lea.vmem %s0, 3
    %v78 = vld [vmem:[%s77] sm:$0x1]
    %79 = vrot.lane.b32.xlu0 %v78, 24
    %v80 = vpop.permute.xlu0 %79
    %vm81 = vcmask 261312
    %82 = vst.msk [vmem:[#allocation0] sm:$0x1] %vm81, %v80
    %s83 = scalar_lea.vmem %s0, 2
    %v84 = vld [vmem:[%s83] sm:$0x1]
    %85 = vrot.lane.b32.xlu0 %v84, 16
    %v86 = vpop.permute.xlu0 %85
    %vm87 = vcmask 195712
    %88 = vst.msk [vmem:[#allocation0] sm:$0x1] %vm87, %v86
    %s89 = scalar_lea.vmem %s0, 1
    %v90 = vld [vmem:[%s89] sm:$0x1]
    %91 = vrot.lane.b32.xlu0 %v90, 8
    %v92 = vpop.permute.xlu0 %91
    %vm93 = vcmask 130112
    %94 = vst.msk [vmem:[#allocation0] sm:$0x1] %vm93, %v92
    %s96 = ssub.s32 2, 1
    %v97 = vld [vmem:[#allocation0] sm:%s96]
    %s99 = ssub.s32 2, 1
    %100 = vst [vmem:[%s1] sm:%s99] %v97

// kernel: var_block_simple.1
$region0: #{var_block_simple.1}
  #allocation0 [shape = 'u32[]', space=smem, size = 0x4, offset = 0x4, fixed_abs, tag = 'smem constant byte address 0x4 - core index']
  #allocation1 [shape = 'u32[72,128]{1,0:T(1,128)}', space=vmem, size = 0x9000, scoped, tag = 'internal scratch']
  #allocation2 [shape = 'f32[1,1]{1,0:T(1,128)S(6)}', space=smem, size = 0x200, scoped, tag = 'scoped memory for var_block_simple.1']
  %s0 = inlined_call_operand.vmem [shape: f32[32,128], index: 0, kind: input, shape index: {}]
  %s1 = inlined_call_operand.vmem [shape: f32[384,128], index: 1, kind: input, shape index: {}]
  %s2 = inlined_call_operand.vmem [shape: f32[1,128], index: 2, kind: input, shape index: {}]
  %s3 = inlined_call_operand.vmem [shape: f32[384,128], index: 3, kind: input, shape index: {}]
  %s4 = inlined_call_operand.vmem [shape: f32[1,128], index: 4, kind: input, shape index: {}]
  %s5 = inlined_call_operand.<no memory space> [shape: f32[1,1], index: 5, kind: input, shape index: {}]
  %s6 = inlined_call_operand.vmem [shape: f32[32,128], index: 6, kind: output, shape index: {}]
  %s7 = sld [smem:[#allocation0]]
  $region34: #{var_block_simple.1} parent=0
    _
  %s9 = ssub.s32 1, %s7
  %s10 = scalar_select 0, %s9, %s7
  %11 = sst [smem:[#allocation2]] %s5
  // Predicated region
  $region2: #{var_block_simple.1} parent=0 // pred_check
    _
  $region3: #{var_block_simple.1} parent=0 // pred_check_branch
    %13 = sbr.rel (0) target = $region5
  $region4: #{var_block_simple.1} parent=0 // pred_region
    _
  $region5: #{var_block_simple.1} parent=0 // pred_fallthru
    _
  // Predicated region
  $region6: #{var_block_simple.1} parent=0 // pred_check
    _
  $region7: #{var_block_simple.1} parent=0 // pred_check_branch
    %15 = sbr.rel (0) target = $region9
  $region8: #{var_block_simple.1} parent=0 // pred_region
    _
  $region9: #{var_block_simple.1} parent=0 // pred_fallthru
    _
  // Predicated region
  $region10: #{var_block_simple.1} parent=0 // pred_check
    _
  $region11: #{var_block_simple.1} parent=0 // pred_check_branch
    %17 = sbr.rel (0) target = $region13
  $region12: #{var_block_simple.1} parent=0 // pred_region
    _
  $region13: #{var_block_simple.1} parent=0 // pred_fallthru
    _
  // Predicated region
  $region14: #{var_block_simple.1} parent=0 // pred_check
    _
  $region15: #{var_block_simple.1} parent=0 // pred_check_branch
    %19 = sbr.rel (0) target = $region17
  $region16: #{var_block_simple.1} parent=0 // pred_region
    _
  $region17: #{var_block_simple.1} parent=0 // pred_fallthru
    _
  // Predicated region
  $region18: #{var_block_simple.1} parent=0 // pred_check
    _
  $region19: #{var_block_simple.1} parent=0 // pred_check_branch
    %21 = sbr.rel (0) target = $region21
  $region20: #{var_block_simple.1} parent=0 // pred_region
    _
  $region21: #{var_block_simple.1} parent=0 // pred_fallthru
    _
  // Predicated region
  $region22: #{var_block_simple.1} parent=0 // pred_check
    _
  $region23: #{var_block_simple.1} parent=0 // pred_check_branch
    %23 = sbr.rel (0) target = $region25
  $region24: #{var_block_simple.1} parent=0 // pred_region
    _
  $region25: #{var_block_simple.1} parent=0 // pred_fallthru
    _
  %v24 = vld [vmem:[%s0] sm:$0xff]
  %v25 = vld [vmem:[%s0 + $0x8] sm:$0xff]
  %v26 = vld [vmem:[%s0 + $0x10] sm:$0xff]
  %v27 = vld [vmem:[%s0 + $0x18] sm:$0xff]
  %v28 = vlaneseq
  %v29 = vshrl.u32 %v28, 7
  %v30 = vadd.s32 %v29, 8
  %v31 = vadd.s32 %v29, 16
  %v32 = vadd.s32 %v29, 24
  %vm33 = vcmp.lt.s32.totalorder %v29, 0
  %v34 = vsub.s32 0, %v29
  %v35 = vsel %vm33, %v34, %v29
  %v36 = vshrl.u32 %v35, 4
  %v37 = vand.u32 %v35, 15
  %v38 = vsub.s32 0, %v37
  %v39 = vsel %vm33, %v38, %v37
  %vm40 = vcmp.lt.s32.totalorder %v30, 0
  %v41 = vsub.s32 0, %v30
  %v42 = vsel %vm40, %v41, %v30
  %v43 = vshrl.u32 %v42, 4
  %v44 = vand.u32 %v42, 15
  %v45 = vsub.s32 0, %v44
  %v46 = vsel %vm40, %v45, %v44
  %vm47 = vcmp.lt.s32.totalorder %v31, 0
  %v48 = vsub.s32 0, %v31
  %v49 = vsel %vm47, %v48, %v31
  %v50 = vshrl.u32 %v49, 4
  %v51 = vand.u32 %v49, 15
  %v52 = vsub.s32 0, %v51
  %v53 = vsel %vm47, %v52, %v51
  %vm54 = vcmp.lt.s32.totalorder %v32, 0
  %v55 = vsub.s32 0, %v32
  %v56 = vsel %vm54, %v55, %v32
  %v57 = vshrl.u32 %v56, 4
  %v58 = vand.u32 %v56, 15
  %v59 = vsub.s32 0, %v58
  %v60 = vsel %vm54, %v59, %v58
  %vm61 = vcmp.ne.s32.totalorder %v39, 0
  %vm62 = vcmp.ne.s32.totalorder %v46, 0
  %vm63 = vcmp.ne.s32.totalorder %v53, 0
  %vm64 = vcmp.ne.s32.totalorder %v60, 0
  %vm65 = vcmp.lt.s32.totalorder %v39, 0
  %vm66 = vcmp.lt.s32.totalorder %v46, 0
  %vm67 = vcmp.lt.s32.totalorder %v53, 0
  %vm68 = vcmp.lt.s32.totalorder %v60, 0
  %vm69 = vmand %vm65, %vm61
  %vm70 = vmand %vm66, %vm62
  %vm71 = vmand %vm67, %vm63
  %vm72 = vmand %vm68, %vm64
  %v73 = vadd.s32 %v39, 16
  %v74 = vadd.s32 %v46, 16
  %v75 = vadd.s32 %v53, 16
  %v76 = vadd.s32 %v60, 16
  %v77 = vsel %vm69, %v73, %v39
  %v78 = vsel %vm70, %v74, %v46
  %v79 = vsel %vm71, %v75, %v53
  %v80 = vsel %vm72, %v76, %v60
  %vm81 = vcmp.ne.s32.totalorder %v77, 0
  %vm82 = vcmp.ne.s32.totalorder %v78, 0
  %vm83 = vcmp.ne.s32.totalorder %v79, 0
  %vm84 = vcmp.ne.s32.totalorder %v80, 0
  %vm85 = vcmp.ne.s32.totalorder %v77, 15
  %vm86 = vcmp.ne.s32.totalorder %v78, 15
  %vm87 = vcmp.ne.s32.totalorder %v79, 15
  %vm88 = vcmp.ne.s32.totalorder %v80, 15
  %vm93 = vcmask 1040384
  %v94 = vrot.slane %v24, 7
  %v95 = vrot.slane %v25, 7
  %v96 = vsel %vm93, %v94, %v95
  %v97 = vrot.slane %v26, 7
  %v98 = vsel %vm93, %v95, %v97
  %v99 = vrot.slane %v27, 7
  %v100 = vsel %vm93, %v97, %v99
  %v105 = vsel %vm93, 0.0, %v94
  %v106 = vsel %vm81, 1, 0
  %v107 = vsel %vm82, 1, 0
  %v108 = vsel %vm83, 1, 0
  %v109 = vsel %vm84, 1, 0
  %vm110 = vcmp.eq.s32.totalorder %v106, 1
  %vm111 = vcmp.eq.s32.totalorder %v107, 1
  %vm112 = vcmp.eq.s32.totalorder %v108, 1
  %vm113 = vcmp.eq.s32.totalorder %v109, 1
  %v114 = vsel %vm110, %v105, 0.0
  %v115 = vsel %vm111, %v96, 0.0
  %v116 = vsel %vm112, %v98, 0.0
  %v117 = vsel %vm113, %v100, 0.0
  %vm118 = vcmask 1046528
  %v119 = vrot.slane %v24, 1
  %v120 = vrot.slane %v25, 1
  %v121 = vsel %vm118, %v119, %v120
  %v122 = vrot.slane %v26, 1
  %v123 = vsel %vm118, %v120, %v122
  %v124 = vrot.slane %v27, 1
  %v125 = vsel %vm118, %v122, %v124
  %v130 = vsel %vm118, %v124, 0.0
  %v131 = vsel %vm85, 1, 0
  %v132 = vsel %vm86, 1, 0
  %v133 = vsel %vm87, 1, 0
  %v134 = vsel %vm88, 1, 0
  %vm135 = vcmp.eq.s32.totalorder %v131, 1
  %vm136 = vcmp.eq.s32.totalorder %v132, 1
  %vm137 = vcmp.eq.s32.totalorder %v133, 1
  %vm138 = vcmp.eq.s32.totalorder %v134, 1
  %v139 = vsel %vm135, %v121, 0.0
  %v140 = vsel %vm136, %v123, 0.0
  %v141 = vsel %vm137, %v125, 0.0
  %v142 = vsel %vm138, %v130, 0.0
  %v143 = vld [vmem:[%s1] sm:$0xff]
  %v144 = vld [vmem:[%s1 + $0x8] sm:$0xff]
  %v145 = vld [vmem:[%s1 + $0x10] sm:$0xff]
  %v146 = vld [vmem:[%s1 + $0x18] sm:$0xff]
  %v147 = vld [vmem:[%s1 + $0x20] sm:$0xff]
  %v148 = vld [vmem:[%s1 + $0x28] sm:$0xff]
  %v149 = vld [vmem:[%s1 + $0x30] sm:$0xff]
  %v150 = vld [vmem:[%s1 + $0x38] sm:$0xff]
  %v151 = vld [vmem:[%s1 + $0x40] sm:$0xff]
  %v152 = vld [vmem:[%s1 + $0x48] sm:$0xff]
  %v153 = vld [vmem:[%s1 + $0x50] sm:$0xff]
  %v154 = vld [vmem:[%s1 + $0x58] sm:$0xff]
  %v155 = vld [vmem:[%s1 + $0x60] sm:$0xff]
  %v156 = vld [vmem:[%s1 + $0x68] sm:$0xff]
  %v157 = vld [vmem:[%s1 + $0x70] sm:$0xff]
  %v158 = vld [vmem:[%s1 + $0x78] sm:$0xff]
  %v159 = vld [vmem:[%s1 + $0x80] sm:$0xff]
  %v160 = vld [vmem:[%s1 + $0x88] sm:$0xff]
  %v161 = vld [vmem:[%s1 + $0x90] sm:$0xff]
  %v162 = vld [vmem:[%s1 + $0x98] sm:$0xff]
  %v163 = vld [vmem:[%s1 + $0xa0] sm:$0xff]
  %v164 = vld [vmem:[%s1 + $0xa8] sm:$0xff]
  %v165 = vld [vmem:[%s1 + $0xb0] sm:$0xff]
  %v166 = vld [vmem:[%s1 + $0xb8] sm:$0xff]
  %v167 = vld [vmem:[%s1 + $0xc0] sm:$0xff]
  %v168 = vld [vmem:[%s1 + $0xc8] sm:$0xff]
  %v169 = vld [vmem:[%s1 + $0xd0] sm:$0xff]
  %v170 = vld [vmem:[%s1 + $0xd8] sm:$0xff]
  %v171 = vld [vmem:[%s1 + $0xe0] sm:$0xff]
  %v172 = vld [vmem:[%s1 + $0xe8] sm:$0xff]
  %v173 = vld [vmem:[%s1 + $0xf0] sm:$0xff]
  %v174 = vld [vmem:[%s1 + $0xf8] sm:$0xff]
  %v175 = vld [vmem:[%s1 + $0x100] sm:$0xff]
  %v176 = vld [vmem:[%s1 + $0x108] sm:$0xff]
  %v177 = vld [vmem:[%s1 + $0x110] sm:$0xff]
  %v178 = vld [vmem:[%s1 + $0x118] sm:$0xff]
  %v179 = vld [vmem:[%s1 + $0x120] sm:$0xff]
  %v180 = vld [vmem:[%s1 + $0x128] sm:$0xff]
  %v181 = vld [vmem:[%s1 + $0x130] sm:$0xff]
  %v182 = vld [vmem:[%s1 + $0x138] sm:$0xff]
  %v183 = vld [vmem:[%s1 + $0x140] sm:$0xff]
  %v184 = vld [vmem:[%s1 + $0x148] sm:$0xff]
  %v185 = vld [vmem:[%s1 + $0x150] sm:$0xff]
  %v186 = vld [vmem:[%s1 + $0x158] sm:$0xff]
  %v187 = vld [vmem:[%s1 + $0x160] sm:$0xff]
  %v188 = vld [vmem:[%s1 + $0x168] sm:$0xff]
  %v189 = vld [vmem:[%s1 + $0x170] sm:$0xff]
  %v190 = vld [vmem:[%s1 + $0x178] sm:$0xff]
  %v191 = vld [vmem:[%s2] sm:$0x1]
  %v193 = vperm.slane %v191, 0
  %195 = vmatpush.msra.mxu0 %v158
  %196 = vmatpush.msra.mxu0 %v157
  %197 = vmatpush.msra.mxu0 %v156
  %198 = vmatpush.msra.mxu0 %v155
  %199 = vmatpush.msra.mxu0 %v154
  %200 = vmatpush.msra.mxu0 %v153
  %201 = vmatpush.msra.mxu0 %v152
  %202 = vmatpush.msra.mxu0 %v151
  %203 = vmatpush.msra.mxu0 %v150
  %204 = vmatpush.msra.mxu0 %v149
  %205 = vmatpush.msra.mxu0 %v148
  %206 = vmatpush.msra.mxu0 %v147
  %207 = vmatpush.msra.mxu0 %v146
  %208 = vmatpush.msra.mxu0 %v145
  %209 = vmatpush.msra.mxu0 %v144
  %210 = vmatpush.msra.mxu0 %v143
  %211 = vmatmul.f32.gmra.mxu0 %v114
  %v212 = vpop.f32.mrf.mxu0
  %v213 = vadd.f32 %v193, %v212
  %214 = vmatmul.f32.gmra.mxu0 %v115
  %v215 = vpop.f32.mrf.mxu0
  %v216 = vadd.f32 %v193, %v215
  %217 = vmatmul.f32.gmra.mxu0 %v116
  %v218 = vpop.f32.mrf.mxu0
  %v219 = vadd.f32 %v193, %v218
  %220 = vmatmul.f32.gmra.mxu0 %v117
  %v221 = vpop.f32.mrf.mxu0
  %v222 = vadd.f32 %v193, %v221
  %223 = vdwg.mxu0
  %224 = vmatpush.msra.mxu0 %v174
  %225 = vmatpush.msra.mxu0 %v173
  %226 = vmatpush.msra.mxu0 %v172
  %227 = vmatpush.msra.mxu0 %v171
  %228 = vmatpush.msra.mxu0 %v170
  %229 = vmatpush.msra.mxu0 %v169
  %230 = vmatpush.msra.mxu0 %v168
  %231 = vmatpush.msra.mxu0 %v167
  %232 = vmatpush.msra.mxu0 %v166
  %233 = vmatpush.msra.mxu0 %v165
  %234 = vmatpush.msra.mxu0 %v164
  %235 = vmatpush.msra.mxu0 %v163
  %236 = vmatpush.msra.mxu0 %v162
  %237 = vmatpush.msra.mxu0 %v161
  %238 = vmatpush.msra.mxu0 %v160
  %239 = vmatpush.msra.mxu0 %v159
  %240 = vmatmul.f32.gmra.mxu0 %v24
  %v241 = vpop.f32.mrf.mxu0
  %v242 = vadd.f32 %v213, %v241
  %243 = vmatmul.f32.gmra.mxu0 %v25
  %v244 = vpop.f32.mrf.mxu0
  %v245 = vadd.f32 %v216, %v244
  %246 = vmatmul.f32.gmra.mxu0 %v26
  %v247 = vpop.f32.mrf.mxu0
  %v248 = vadd.f32 %v219, %v247
  %249 = vmatmul.f32.gmra.mxu0 %v27
  %v250 = vpop.f32.mrf.mxu0
  %v251 = vadd.f32 %v222, %v250
  %252 = vdwg.mxu0
  %253 = vmatpush.msra.mxu0 %v190
  %254 = vmatpush.msra.mxu0 %v189
  %255 = vmatpush.msra.mxu0 %v188
  %256 = vmatpush.msra.mxu0 %v187
  %257 = vmatpush.msra.mxu0 %v186
  %258 = vmatpush.msra.mxu0 %v185
  %259 = vmatpush.msra.mxu0 %v184
  %260 = vmatpush.msra.mxu0 %v183
  %261 = vmatpush.msra.mxu0 %v182
  %262 = vmatpush.msra.mxu0 %v181
  %263 = vmatpush.msra.mxu0 %v180
  %264 = vmatpush.msra.mxu0 %v179
  %265 = vmatpush.msra.mxu0 %v178
  %266 = vmatpush.msra.mxu0 %v177
  %267 = vmatpush.msra.mxu0 %v176
  %268 = vmatpush.msra.mxu0 %v175
  %269 = vmatmul.f32.gmra.mxu0 %v139
  %v270 = vpop.f32.mrf.mxu0
  %v271 = vadd.f32 %v242, %v270
  %272 = vmatmul.f32.gmra.mxu0 %v140
  %v273 = vpop.f32.mrf.mxu0
  %v274 = vadd.f32 %v245, %v273
  %275 = vmatmul.f32.gmra.mxu0 %v141
  %v276 = vpop.f32.mrf.mxu0
  %v277 = vadd.f32 %v248, %v276
  %278 = vmatmul.f32.gmra.mxu0 %v142
  %v279 = vpop.f32.mrf.mxu0
  %v280 = vadd.f32 %v251, %v279
  %281 = vdwg.mxu0
  %v282 = vmax.f32 %v271, 0.0
  %v283 = vmax.f32 %v274, 0.0
  %v284 = vmax.f32 %v277, 0.0
  %v285 = vmax.f32 %v280, 0.0
  %v286 = vand.u32 2147483647, %v271
  %v287 = vand.u32 2147483647, %v274
  %v288 = vand.u32 2147483647, %v277
  %v289 = vand.u32 2147483647, %v280
  %v290 = vsub.f32 0.0, %v286
  %v291 = vsub.f32 0.0, %v287
  %v292 = vsub.f32 0.0, %v288
  %v293 = vsub.f32 0.0, %v289
  %v294 = vmul.f32 %v290, 1.442695
  %v295 = vpow.pop %v294
  %v296 = vmul.f32 %v291, 1.442695
  %v297 = vpow.pop %v296
  %v298 = vmul.f32 %v292, 1.442695
  %v299 = vpow.pop %v298
  %v300 = vmul.f32 %v293, 1.442695
  %v301 = vpow.pop %v300
  %v302 = vadd.f32 %v295, 1.0
  %v303 = vadd.f32 %v297, 1.0
  %v304 = vadd.f32 %v299, 1.0
  %v305 = vadd.f32 %v301, 1.0
  %v306 = vlog2.pop %v302
  %v307 = vmul.f32 %v306, 0.6931472
  %v308 = vlog2.pop %v303
  %v309 = vmul.f32 %v308, 0.6931472
  %v310 = vlog2.pop %v304
  %v311 = vmul.f32 %v310, 0.6931472
  %v312 = vlog2.pop %v305
  %v313 = vmul.f32 %v312, 0.6931472
  %v314 = vadd.f32 %v282, %v307
  %v315 = vadd.f32 %v283, %v309
  %v316 = vadd.f32 %v284, %v311
  %v317 = vadd.f32 %v285, %v313
  %vm318 = vcmp.gt.f32.partialorder %v271, 20.0
  %vm319 = vcmp.gt.f32.partialorder %v274, 20.0
  %vm320 = vcmp.gt.f32.partialorder %v277, 20.0
  %vm321 = vcmp.gt.f32.partialorder %v280, 20.0
  %v322 = vsel %vm318, %v271, %v314
  %v323 = vsel %vm319, %v274, %v315
  %v324 = vsel %vm320, %v277, %v316
  %v325 = vsel %vm321, %v280, %v317
  %v326 = vmul.f32 %v322, %v24
  %v327 = vmul.f32 %v323, %v25
  %v328 = vmul.f32 %v324, %v26
  %v329 = vmul.f32 %v325, %v27
  %v334 = vrot.slane %v326, 7
  %v335 = vrot.slane %v327, 7
  %v336 = vsel %vm93, %v334, %v335
  %v337 = vrot.slane %v328, 7
  %v338 = vsel %vm93, %v335, %v337
  %v339 = vrot.slane %v329, 7
  %v340 = vsel %vm93, %v337, %v339
  %v345 = vsel %vm93, 0.0, %v334
  %v346 = vsel %vm110, %v345, 0.0
  %v347 = vsel %vm111, %v336, 0.0
  %v348 = vsel %vm112, %v338, 0.0
  %v349 = vsel %vm113, %v340, 0.0
  %v350 = vrot.slane %v326, 1
  %v351 = vrot.slane %v327, 1
  %v352 = vsel %vm118, %v350, %v351
  %v353 = vrot.slane %v328, 1
  %v354 = vsel %vm118, %v351, %v353
  %v355 = vrot.slane %v329, 1
  %v356 = vsel %vm118, %v353, %v355
  %v361 = vsel %vm118, %v355, 0.0
  %v362 = vsel %vm135, %v352, 0.0
  %v363 = vsel %vm136, %v354, 0.0
  %v364 = vsel %vm137, %v356, 0.0
  %v365 = vsel %vm138, %v361, 0.0
  %v366 = vld [vmem:[%s3] sm:$0xff]
  %v367 = vld [vmem:[%s3 + $0x8] sm:$0xff]
  %v368 = vld [vmem:[%s3 + $0x10] sm:$0xff]
  %v369 = vld [vmem:[%s3 + $0x18] sm:$0xff]
  %v370 = vld [vmem:[%s3 + $0x20] sm:$0xff]
  %v371 = vld [vmem:[%s3 + $0x28] sm:$0xff]
  %v372 = vld [vmem:[%s3 + $0x30] sm:$0xff]
  %v373 = vld [vmem:[%s3 + $0x38] sm:$0xff]
  %v374 = vld [vmem:[%s3 + $0x40] sm:$0xff]
  %v375 = vld [vmem:[%s3 + $0x48] sm:$0xff]
  %v376 = vld [vmem:[%s3 + $0x50] sm:$0xff]
  %v377 = vld [vmem:[%s3 + $0x58] sm:$0xff]
  %v378 = vld [vmem:[%s3 + $0x60] sm:$0xff]
  %v379 = vld [vmem:[%s3 + $0x68] sm:$0xff]
  %v380 = vld [vmem:[%s3 + $0x70] sm:$0xff]
  %v381 = vld [vmem:[%s3 + $0x78] sm:$0xff]
  %v382 = vld [vmem:[%s3 + $0x80] sm:$0xff]
  %v383 = vld [vmem:[%s3 + $0x88] sm:$0xff]
  %v384 = vld [vmem:[%s3 + $0x90] sm:$0xff]
  %v385 = vld [vmem:[%s3 + $0x98] sm:$0xff]
  %v386 = vld [vmem:[%s3 + $0xa0] sm:$0xff]
  %v387 = vld [vmem:[%s3 + $0xa8] sm:$0xff]
  %v388 = vld [vmem:[%s3 + $0xb0] sm:$0xff]
  %v389 = vld [vmem:[%s3 + $0xb8] sm:$0xff]
  %v390 = vld [vmem:[%s3 + $0xc0] sm:$0xff]
  %v391 = vld [vmem:[%s3 + $0xc8] sm:$0xff]
  %v392 = vld [vmem:[%s3 + $0xd0] sm:$0xff]
  %v393 = vld [vmem:[%s3 + $0xd8] sm:$0xff]
  %v394 = vld [vmem:[%s3 + $0xe0] sm:$0xff]
  %v395 = vld [vmem:[%s3 + $0xe8] sm:$0xff]
  %v396 = vld [vmem:[%s3 + $0xf0] sm:$0xff]
  %v397 = vld [vmem:[%s3 + $0xf8] sm:$0xff]
  %v398 = vld [vmem:[%s3 + $0x100] sm:$0xff]
  %v399 = vld [vmem:[%s3 + $0x108] sm:$0xff]
  %v400 = vld [vmem:[%s3 + $0x110] sm:$0xff]
  %v401 = vld [vmem:[%s3 + $0x118] sm:$0xff]
  %v402 = vld [vmem:[%s3 + $0x120] sm:$0xff]
  %v403 = vld [vmem:[%s3 + $0x128] sm:$0xff]
  %v404 = vld [vmem:[%s3 + $0x130] sm:$0xff]
  %v405 = vld [vmem:[%s3 + $0x138] sm:$0xff]
  %v406 = vld [vmem:[%s3 + $0x140] sm:$0xff]
  %v407 = vld [vmem:[%s3 + $0x148] sm:$0xff]
  %v408 = vld [vmem:[%s3 + $0x150] sm:$0xff]
  %v409 = vld [vmem:[%s3 + $0x158] sm:$0xff]
  %v410 = vld [vmem:[%s3 + $0x160] sm:$0xff]
  %v411 = vld [vmem:[%s3 + $0x168] sm:$0xff]
  %v412 = vld [vmem:[%s3 + $0x170] sm:$0xff]
  %v413 = vld [vmem:[%s3 + $0x178] sm:$0xff]
  %v414 = vld [vmem:[%s4] sm:$0x1]
  %v416 = vperm.slane %v414, 0
  %418 = vmatpush.msra.mxu0 %v381
  %419 = vmatpush.msra.mxu0 %v380
  %420 = vmatpush.msra.mxu0 %v379
  %421 = vmatpush.msra.mxu0 %v378
  %422 = vmatpush.msra.mxu0 %v377
  %423 = vmatpush.msra.mxu0 %v376
  %424 = vmatpush.msra.mxu0 %v375
  %425 = vmatpush.msra.mxu0 %v374
  %426 = vmatpush.msra.mxu0 %v373
  %427 = vmatpush.msra.mxu0 %v372
  %428 = vmatpush.msra.mxu0 %v371
  %429 = vmatpush.msra.mxu0 %v370
  %430 = vmatpush.msra.mxu0 %v369
  %431 = vmatpush.msra.mxu0 %v368
  %432 = vmatpush.msra.mxu0 %v367
  %433 = vmatpush.msra.mxu0 %v366
  %434 = vmatmul.f32.gmra.mxu0 %v346
  %v435 = vpop.f32.mrf.mxu0
  %v436 = vadd.f32 %v416, %v435
  %437 = vmatmul.f32.gmra.mxu0 %v347
  %v438 = vpop.f32.mrf.mxu0
  %v439 = vadd.f32 %v416, %v438
  %440 = vmatmul.f32.gmra.mxu0 %v348
  %v441 = vpop.f32.mrf.mxu0
  %v442 = vadd.f32 %v416, %v441
  %443 = vmatmul.f32.gmra.mxu0 %v349
  %v444 = vpop.f32.mrf.mxu0
  %v445 = vadd.f32 %v416, %v444
  %446 = vdwg.mxu0
  %447 = vmatpush.msra.mxu0 %v397
  %448 = vmatpush.msra.mxu0 %v396
  %449 = vmatpush.msra.mxu0 %v395
  %450 = vmatpush.msra.mxu0 %v394
  %451 = vmatpush.msra.mxu0 %v393
  %452 = vmatpush.msra.mxu0 %v392
  %453 = vmatpush.msra.mxu0 %v391
  %454 = vmatpush.msra.mxu0 %v390
  %455 = vmatpush.msra.mxu0 %v389
  %456 = vmatpush.msra.mxu0 %v388
  %457 = vmatpush.msra.mxu0 %v387
  %458 = vmatpush.msra.mxu0 %v386
  %459 = vmatpush.msra.mxu0 %v385
  %460 = vmatpush.msra.mxu0 %v384
  %461 = vmatpush.msra.mxu0 %v383
  %462 = vmatpush.msra.mxu0 %v382
  %463 = vmatmul.f32.gmra.mxu0 %v326
  %v464 = vpop.f32.mrf.mxu0
  %v465 = vadd.f32 %v436, %v464
  %466 = vmatmul.f32.gmra.mxu0 %v327
  %v467 = vpop.f32.mrf.mxu0
  %v468 = vadd.f32 %v439, %v467
  %469 = vmatmul.f32.gmra.mxu0 %v328
  %v470 = vpop.f32.mrf.mxu0
  %v471 = vadd.f32 %v442, %v470
  %472 = vmatmul.f32.gmra.mxu0 %v329
  %v473 = vpop.f32.mrf.mxu0
  %v474 = vadd.f32 %v445, %v473
  %475 = vdwg.mxu0
  %476 = vmatpush.msra.mxu0 %v413
  %477 = vmatpush.msra.mxu0 %v412
  %478 = vmatpush.msra.mxu0 %v411
  %479 = vmatpush.msra.mxu0 %v410
  %480 = vmatpush.msra.mxu0 %v409
  %481 = vmatpush.msra.mxu0 %v408
  %482 = vmatpush.msra.mxu0 %v407
  %483 = vmatpush.msra.mxu0 %v406
  %484 = vmatpush.msra.mxu0 %v405
  %485 = vmatpush.msra.mxu0 %v404
  %486 = vmatpush.msra.mxu0 %v403
  %487 = vmatpush.msra.mxu0 %v402
  %488 = vmatpush.msra.mxu0 %v401
  %489 = vmatpush.msra.mxu0 %v400
  %490 = vmatpush.msra.mxu0 %v399
  %491 = vmatpush.msra.mxu0 %v398
  %492 = vmatmul.f32.gmra.mxu0 %v362
  %v493 = vpop.f32.mrf.mxu0
  %v494 = vadd.f32 %v465, %v493
  %495 = vmatmul.f32.gmra.mxu0 %v363
  %v496 = vpop.f32.mrf.mxu0
  %v497 = vadd.f32 %v468, %v496
  %498 = vmatmul.f32.gmra.mxu0 %v364
  %v499 = vpop.f32.mrf.mxu0
  %v500 = vadd.f32 %v471, %v499
  %501 = vmatmul.f32.gmra.mxu0 %v365
  %v502 = vpop.f32.mrf.mxu0
  %v503 = vadd.f32 %v474, %v502
  %504 = vdwg.mxu0
  %s505 = sld [smem:[#allocation2]]
  %vm506 = vcmp.ge.f32.partialorder %v494, 0.0
  %vm507 = vcmp.ge.f32.partialorder %v497, 0.0
  %vm508 = vcmp.ge.f32.partialorder %v500, 0.0
  %vm509 = vcmp.ge.f32.partialorder %v503, 0.0
  %v510 = vstv %s505
  %v511 = vmul.f32 %v510, %v494
  %v512 = vmul.f32 %v510, %v497
  %v513 = vmul.f32 %v510, %v500
  %v514 = vmul.f32 %v510, %v503
  %v515 = vsel %vm506, %v494, %v511
  %v516 = vsel %vm507, %v497, %v512
  %v517 = vsel %vm508, %v500, %v513
  %v518 = vsel %vm509, %v503, %v514
  %v519 = vadd.f32 %v515, %v24
  %v520 = vadd.f32 %v516, %v25
  %v521 = vadd.f32 %v517, %v26
  %v522 = vadd.f32 %v518, %v27
  %523 = vst [vmem:[%s6] sm:$0xff] %v519
  %524 = vst [vmem:[%s6 + $0x8] sm:$0xff] %v520
  %525 = vst [vmem:[%s6 + $0x10] sm:$0xff] %v521
  %526 = vst [vmem:[%s6 + $0x18] sm:$0xff] %v522
  // Predicated region
  $region26: #{var_block_simple.1} parent=0 // pred_check
    _
  $region27: #{var_block_simple.1} parent=0 // pred_check_branch
    %528 = sbr.rel (0) target = $region29
  $region28: #{var_block_simple.1} parent=0 // pred_region
    _
  $region29: #{var_block_simple.1} parent=0 // pred_fallthru
    _
  // Predicated region
  $region30: #{var_block_simple.1} parent=0 // pred_check
    _
  $region31: #{var_block_simple.1} parent=0 // pred_check_branch
    %530 = sbr.rel (0) target = $region33
  $region32: #{var_block_simple.1} parent=0 // pred_region
    _
  $region33: #{var_block_simple.1} parent=0 // pred_fallthru
    _

</llo_original>
